<compile_context>
chip_gen: v5e
topology: v5e:2x2
jax: 0.10.0
libtpu: 0.0.40
codegen_flags: <defaults>
</compile_context>

<pallas_src>
import jax
import jax.numpy as jnp
from jax.experimental import pallas as pl
from jax.experimental.pallas import tpu as pltpu


def _dqn_kernel(x_ref, w1, b1, w2, b2, w3, b3, w4, b4, out_ref):
    # x tile: (TB, in_dim) f32.  Weights are bf16 (cast in wrapper), biases f32.
    cd = w1.dtype  # MXU compute dtype (bf16)

    def linear(x_f32, w_ref, b_ref):
        acc = jnp.dot(x_f32.astype(cd), w_ref[...],
                      preferred_element_type=jnp.float32)
        return acc + b_ref[...]          # bias add in f32 on the VPU

    h = jnp.maximum(linear(x_ref[...], w1, b1), 0.0)
    h = jnp.maximum(linear(h, w2, b2), 0.0)
    h = jnp.maximum(linear(h, w3, b3), 0.0)
    out_ref[...] = linear(h, w4, b4).astype(out_ref.dtype)


def _round_up(x, m):
    return ((x + m - 1) // m) * m


def dqn_forward(state, params, *, block_b=512, compute_dtype=jnp.bfloat16):
    """state: (B, input_dim) f32.  Returns actions: (B, n_actions) f32."""
    B, in_dim = state.shape
    n_actions = params["w4"].shape[1]

    # Batch tile: sublane-aligned (multiple of 8), capped at block_b rows.
    TB = min(block_b, _round_up(B, 8))
    pad = (-B) % TB
    state_in = jnp.pad(state, ((0, pad), (0, 0))) if pad else state
    Bp = B + pad
    num_blocks = Bp // TB

    # Flatten params; cast weights to the MXU compute dtype, keep biases f32.
    args = [state_in]
    in_specs = [pl.BlockSpec((TB, in_dim), lambda i: (i, 0))]
    for k in range(1, 5):
        w = params[f"w{k}"].astype(compute_dtype)
        b = params[f"b{k}"].astype(jnp.float32)
        args += [w, b]
        in_specs += [
            pl.BlockSpec(w.shape, lambda i: (0, 0)),  # weights VMEM-resident
            pl.BlockSpec(b.shape, lambda i: (0, 0)),
        ]

    dims = [in_dim, params["w1"].shape[1], params["w2"].shape[1],
            params["w3"].shape[1], n_actions]
    flops = 2 * Bp * sum(dims[i] * dims[i + 1] for i in range(4))
    weight_bytes = sum(params[f"w{k}"].size * 2 + params[f"b{k}"].size * 4
                       for k in range(1, 5))
    bytes_accessed = weight_bytes + Bp * (in_dim + n_actions) * 4
    cost = pl.CostEstimate(flops=flops, transcendentals=0,
                           bytes_accessed=bytes_accessed)

    out = pl.pallas_call(
        _dqn_kernel,
        out_shape=jax.ShapeDtypeStruct((Bp, n_actions), jnp.float32),
        grid=(num_blocks,),
        in_specs=in_specs,
        out_specs=pl.BlockSpec((TB, n_actions), lambda i: (i, 0)),
        compiler_params=pltpu.CompilerParams(
            dimension_semantics=("parallel",)),
        cost_estimate=cost,
    )(*args)

    return out[:B] if pad else out


def init_dqn_params(key, input_dim, fc1_dims, fc2_dims, fc3_dims, n_actions):
    """Deterministic init mimicking nn.Linear's U(-1/sqrt(fan_in), 1/sqrt(fan_in)).
    Weights stored pre-transposed as (in, out); biases as (1, out)."""
    layer_dims = [(input_dim, fc1_dims), (fc1_dims, fc2_dims),
                  (fc2_dims, fc3_dims), (fc3_dims, n_actions)]
    params = {}
    for i, (fan_in, fan_out) in enumerate(layer_dims, start=1):
        key, kw, kb = jax.random.split(key, 3)
        bound = 1.0 / jnp.sqrt(jnp.float32(fan_in))
        params[f"w{i}"] = jax.random.uniform(
            kw, (fan_in, fan_out), jnp.float32, minval=-bound, maxval=bound)
        params[f"b{i}"] = jax.random.uniform(
            kb, (1, fan_out), jnp.float32, minval=-bound, maxval=bound)
    return params


def _reference_forward(state, params, compute_dtype=jnp.bfloat16):
    """Plain-JAX reference mirroring the kernel's precision (bf16 matmul, f32 acc)."""
    def linear(x, w, b):
        return jnp.dot(x.astype(compute_dtype), w.astype(compute_dtype),
                       preferred_element_type=jnp.float32) + b

    h = jnp.maximum(linear(state, params["w1"], params["b1"]), 0.0)
    h = jnp.maximum(linear(h, params["w2"], params["b2"]), 0.0)
    h = jnp.maximum(linear(h, params["w3"], params["b3"]), 0.0)
    return linear(h, params["w4"], params["b4"])


if __name__ == "__main__":
    # Small shapes consistent with the module: DeepQNetwork(lr, input_dims=(8,),
    # fc1_dims=32, fc2_dims=32, fc3_dims=32, n_actions=4), batch=2.
    B, input_dim = 2, 8
    fc1, fc2, fc3, n_actions = 32, 32, 32, 4

    key = jax.random.PRNGKey(0)
    kp, ks = jax.random.split(key)
    params = init_dqn_params(kp, input_dim, fc1, fc2, fc3, n_actions)
    state = jax.random.normal(ks, (B, input_dim), jnp.float32)

    actions = dqn_forward(state, params)
    jax.block_until_ready(actions)

    ref = _reference_forward(state, params)
    assert actions.shape == (B, n_actions)
    assert jnp.allclose(actions, ref, atol=1e-2, rtol=1e-2), "actions mismatch vs reference"

    # TODO(synk): training machinery (Adam optimizer, MSELoss) is out of scope for a
    # forward-pass kernel and is not implemented here.

    print("KERNEL_OK")
</pallas_src>

<mosaic_0001>
module attributes {stable_mosaic.version = 11 : i64} {
  func.func @_dqn_kernel(%arg0: i32, %arg1: memref<8x8xf32, #tpu.memory_space<vmem>>, %arg2: memref<8x32xbf16, #tpu.memory_space<vmem>>, %arg3: memref<1x32xf32, #tpu.memory_space<vmem>>, %arg4: memref<32x32xbf16, #tpu.memory_space<vmem>>, %arg5: memref<1x32xf32, #tpu.memory_space<vmem>>, %arg6: memref<32x32xbf16, #tpu.memory_space<vmem>>, %arg7: memref<1x32xf32, #tpu.memory_space<vmem>>, %arg8: memref<32x4xbf16, #tpu.memory_space<vmem>>, %arg9: memref<1x4xf32, #tpu.memory_space<vmem>>, %arg10: memref<8x4xf32, #tpu.memory_space<vmem>>) attributes {dimension_semantics = [#tpu.dimension_semantics<parallel>], iteration_bounds = array<i64: 1>, scalar_prefetch = 0 : i64, scratch_operands = 0 : i64, tpu.core_type = #tpu.core_type<tc>, window_params = [{transform_indices = @transform_0, window_bounds = array<i64: 8, 8>}, {pipeline_mode = #tpu.pipeline_mode<synchronous>, transform_indices = @transform_1, window_bounds = array<i64: 8, 32>}, {pipeline_mode = #tpu.pipeline_mode<synchronous>, transform_indices = @transform_2, window_bounds = array<i64: 1, 32>}, {pipeline_mode = #tpu.pipeline_mode<synchronous>, transform_indices = @transform_3, window_bounds = array<i64: 32, 32>}, {pipeline_mode = #tpu.pipeline_mode<synchronous>, transform_indices = @transform_4, window_bounds = array<i64: 1, 32>}, {pipeline_mode = #tpu.pipeline_mode<synchronous>, transform_indices = @transform_5, window_bounds = array<i64: 32, 32>}, {pipeline_mode = #tpu.pipeline_mode<synchronous>, transform_indices = @transform_6, window_bounds = array<i64: 1, 32>}, {pipeline_mode = #tpu.pipeline_mode<synchronous>, transform_indices = @transform_7, window_bounds = array<i64: 32, 4>}, {pipeline_mode = #tpu.pipeline_mode<synchronous>, transform_indices = @transform_8, window_bounds = array<i64: 1, 4>}, {transform_indices = @transform_9, window_bounds = array<i64: 8, 4>}]} {
    %c0 = arith.constant 0 : index
    %c0_0 = arith.constant 0 : index
    %0 = vector.load %arg1[%c0, %c0_0] : memref<8x8xf32, #tpu.memory_space<vmem>>, vector<8x8xf32>
    %1 = arith.truncf %0 : vector<8x8xf32> to vector<8x8xbf16>
    %c0_1 = arith.constant 0 : index
    %c0_2 = arith.constant 0 : index
    %2 = vector.load %arg2[%c0_1, %c0_2] : memref<8x32xbf16, #tpu.memory_space<vmem>>, vector<8x32xbf16>
    %cst = arith.constant dense<0.000000e+00> : vector<8x32xf32>
    %3 = tpu.matmul %1, %2, %cst {dimension_numbers = #tpu.dot_dimension_numbers<[1], [0], [0], [1], [0, 0, 1, 1], [], []>} : vector<8x8xbf16>, vector<8x32xbf16>, vector<8x32xf32> -> vector<8x32xf32>
    %c0_3 = arith.constant 0 : index
    %c0_4 = arith.constant 0 : index
    %4 = vector.load %arg3[%c0_3, %c0_4] : memref<1x32xf32, #tpu.memory_space<vmem>>, vector<1x32xf32>
    %5 = vector.broadcast %4 : vector<1x32xf32> to vector<8x32xf32>
    %6 = arith.addf %3, %5 : vector<8x32xf32>
    %cst_5 = arith.constant 0.000000e+00 : f32
    %7 = vector.broadcast %cst_5 : f32 to vector<8x32xf32>
    %8 = arith.maximumf %6, %7 : vector<8x32xf32>
    %9 = arith.truncf %8 : vector<8x32xf32> to vector<8x32xbf16>
    %c0_6 = arith.constant 0 : index
    %c0_7 = arith.constant 0 : index
    %10 = vector.load %arg4[%c0_6, %c0_7] : memref<32x32xbf16, #tpu.memory_space<vmem>>, vector<32x32xbf16>
    %cst_8 = arith.constant dense<0.000000e+00> : vector<8x32xf32>
    %11 = tpu.matmul %9, %10, %cst_8 {dimension_numbers = #tpu.dot_dimension_numbers<[1], [0], [0], [1], [0, 0, 1, 1], [], []>} : vector<8x32xbf16>, vector<32x32xbf16>, vector<8x32xf32> -> vector<8x32xf32>
    %c0_9 = arith.constant 0 : index
    %c0_10 = arith.constant 0 : index
    %12 = vector.load %arg5[%c0_9, %c0_10] : memref<1x32xf32, #tpu.memory_space<vmem>>, vector<1x32xf32>
    %13 = vector.broadcast %12 : vector<1x32xf32> to vector<8x32xf32>
    %14 = arith.addf %11, %13 : vector<8x32xf32>
    %cst_11 = arith.constant 0.000000e+00 : f32
    %15 = vector.broadcast %cst_11 : f32 to vector<8x32xf32>
    %16 = arith.maximumf %14, %15 : vector<8x32xf32>
    %17 = arith.truncf %16 : vector<8x32xf32> to vector<8x32xbf16>
    %c0_12 = arith.constant 0 : index
    %c0_13 = arith.constant 0 : index
    %18 = vector.load %arg6[%c0_12, %c0_13] : memref<32x32xbf16, #tpu.memory_space<vmem>>, vector<32x32xbf16>
    %cst_14 = arith.constant dense<0.000000e+00> : vector<8x32xf32>
    %19 = tpu.matmul %17, %18, %cst_14 {dimension_numbers = #tpu.dot_dimension_numbers<[1], [0], [0], [1], [0, 0, 1, 1], [], []>} : vector<8x32xbf16>, vector<32x32xbf16>, vector<8x32xf32> -> vector<8x32xf32>
    %c0_15 = arith.constant 0 : index
    %c0_16 = arith.constant 0 : index
    %20 = vector.load %arg7[%c0_15, %c0_16] : memref<1x32xf32, #tpu.memory_space<vmem>>, vector<1x32xf32>
    %21 = vector.broadcast %20 : vector<1x32xf32> to vector<8x32xf32>
    %22 = arith.addf %19, %21 : vector<8x32xf32>
    %cst_17 = arith.constant 0.000000e+00 : f32
    %23 = vector.broadcast %cst_17 : f32 to vector<8x32xf32>
    %24 = arith.maximumf %22, %23 : vector<8x32xf32>
    %25 = arith.truncf %24 : vector<8x32xf32> to vector<8x32xbf16>
    %c0_18 = arith.constant 0 : index
    %c0_19 = arith.constant 0 : index
    %26 = vector.load %arg8[%c0_18, %c0_19] : memref<32x4xbf16, #tpu.memory_space<vmem>>, vector<32x4xbf16>
    %cst_20 = arith.constant dense<0.000000e+00> : vector<8x4xf32>
    %27 = tpu.matmul %25, %26, %cst_20 {dimension_numbers = #tpu.dot_dimension_numbers<[1], [0], [0], [1], [0, 0, 1, 1], [], []>} : vector<8x32xbf16>, vector<32x4xbf16>, vector<8x4xf32> -> vector<8x4xf32>
    %c0_21 = arith.constant 0 : index
    %c0_22 = arith.constant 0 : index
    %28 = vector.load %arg9[%c0_21, %c0_22] : memref<1x4xf32, #tpu.memory_space<vmem>>, vector<1x4xf32>
    %29 = vector.broadcast %28 : vector<1x4xf32> to vector<8x4xf32>
    %30 = arith.addf %27, %29 : vector<8x4xf32>
    %c0_23 = arith.constant 0 : index
    %c0_24 = arith.constant 0 : index
    %31 = vector.load %arg10[%c0_23, %c0_24] : memref<8x4xf32, #tpu.memory_space<vmem>>, vector<8x4xf32>
    tpu.vector_store %arg10[%c0_23, %c0_24], %30 {strides = array<i32>} : memref<8x4xf32, #tpu.memory_space<vmem>>, vector<8x4xf32>,
    return
  }
  func.func @transform_0(%arg0: i32) -> (i32, i32) {
    %c0_i32 = arith.constant 0 : i32
    %c0_i32_0 = arith.constant 0 : i32
    return %arg0, %c0_i32 : i32, i32
  }
  func.func @transform_1(%arg0: i32) -> (i32, i32) {
    %c0_i32 = arith.constant 0 : i32
    %c0_i32_0 = arith.constant 0 : i32
    %c0_i32_1 = arith.constant 0 : i32
    return %c0_i32, %c0_i32_0 : i32, i32
  }
  func.func @transform_2(%arg0: i32) -> (i32, i32) {
    %c0_i32 = arith.constant 0 : i32
    %c0_i32_0 = arith.constant 0 : i32
    %c0_i32_1 = arith.constant 0 : i32
    return %c0_i32, %c0_i32_0 : i32, i32
  }
  func.func @transform_3(%arg0: i32) -> (i32, i32) {
    %c0_i32 = arith.constant 0 : i32
    %c0_i32_0 = arith.constant 0 : i32
    %c0_i32_1 = arith.constant 0 : i32
    return %c0_i32, %c0_i32_0 : i32, i32
  }
  func.func @transform_4(%arg0: i32) -> (i32, i32) {
    %c0_i32 = arith.constant 0 : i32
    %c0_i32_0 = arith.constant 0 : i32
    %c0_i32_1 = arith.constant 0 : i32
    return %c0_i32, %c0_i32_0 : i32, i32
  }
  func.func @transform_5(%arg0: i32) -> (i32, i32) {
    %c0_i32 = arith.constant 0 : i32
    %c0_i32_0 = arith.constant 0 : i32
    %c0_i32_1 = arith.constant 0 : i32
    return %c0_i32, %c0_i32_0 : i32, i32
  }
  func.func @transform_6(%arg0: i32) -> (i32, i32) {
    %c0_i32 = arith.constant 0 : i32
    %c0_i32_0 = arith.constant 0 : i32
    %c0_i32_1 = arith.constant 0 : i32
    return %c0_i32, %c0_i32_0 : i32, i32
  }
  func.func @transform_7(%arg0: i32) -> (i32, i32) {
    %c0_i32 = arith.constant 0 : i32
    %c0_i32_0 = arith.constant 0 : i32
    %c0_i32_1 = arith.constant 0 : i32
    return %c0_i32, %c0_i32_0 : i32, i32
  }
  func.func @transform_8(%arg0: i32) -> (i32, i32) {
    %c0_i32 = arith.constant 0 : i32
    %c0_i32_0 = arith.constant 0 : i32
    %c0_i32_1 = arith.constant 0 : i32
    return %c0_i32, %c0_i32_0 : i32, i32
  }
  func.func @transform_9(%arg0: i32) -> (i32, i32) {
    %c0_i32 = arith.constant 0 : i32
    %c0_i32_0 = arith.constant 0 : i32
    return %arg0, %c0_i32 : i32, i32
  }
}

</mosaic_0001>

<llo_original>
// kernel: tpu_custom_call.1
$region0: #{tpu_custom_call.1}
  #allocation0 [shape = 'u32[]', space=smem, size = 0x4, offset = 0x4, fixed_abs, tag = 'smem constant byte address 0x4 - core index']
  #allocation1 [shape = 'u32[72,128]{1,0:T(1,128)}', space=vmem, size = 0x9000, scoped, tag = 'internal scratch']
  %s0 = inlined_call_operand.hbm [shape: f32[8,8], index: 0, kind: input, shape index: {}]
  %s1 = inlined_call_operand.vmem [shape: bf16[8,32], index: 1, kind: input, shape index: {}]
  %s2 = inlined_call_operand.hbm [shape: f32[1,32], index: 2, kind: input, shape index: {}]
  %s3 = inlined_call_operand.vmem [shape: bf16[32,32], index: 3, kind: input, shape index: {}]
  %s4 = inlined_call_operand.hbm [shape: f32[1,32], index: 4, kind: input, shape index: {}]
  %s5 = inlined_call_operand.hbm [shape: bf16[32,32], index: 5, kind: input, shape index: {}]
  %s6 = inlined_call_operand.vmem [shape: f32[1,32], index: 6, kind: input, shape index: {}]
  %s7 = inlined_call_operand.vmem [shape: bf16[32,4], index: 7, kind: input, shape index: {}]
  %s8 = inlined_call_operand.vmem [shape: f32[1,4], index: 8, kind: input, shape index: {}]
  %s9 = inlined_call_operand.vmem [shape: f32[8,4], index: 9, kind: output, shape index: {}]
  %s10 = sld [smem:[#allocation0]]
  $region62: #{tpu_custom_call.1} parent=0
    _
  %s12 = ssub.s32 1, %s10
  %s13 = scalar_select 0, %s12, %s10
  $region1: #{tpu_custom_call.1} parent=0
    #allocation2 [shape = 'u8[4096]{0}', space=vmem, size = 0x1000, scoped, tag = 'input window, operand 0, single buffered']
    #allocation3 [shape = 's32[1]{0}', space=sflag, size = 0x4, scoped, tag = 'scoped memory for tpu_custom_call.1']
    #allocation4 [shape = 'u8[512]{0}', space=vmem, size = 0x400, scoped, tag = 'input window, operand 2, single buffered']
    #allocation5 [shape = 's32[1]{0}', space=sflag, size = 0x4, scoped, tag = 'scoped memory for tpu_custom_call.1']
    #allocation6 [shape = 'u8[512]{0}', space=vmem, size = 0x400, scoped, tag = 'input window, operand 4, single buffered']
    #allocation7 [shape = 'u8[8192]{0}', space=vmem, size = 0x2000, scoped, tag = 'input window, operand 5, single buffered']
    #allocation8 [shape = 's32[1]{0}', space=sflag, size = 0x4, scoped, tag = 'scoped memory for tpu_custom_call.1']
    %14 = vsyncpa [#allocation3], 0
    %15 = vsyncpa [#allocation5], 0
    %16 = vsyncpa [#allocation8], 0
    // Predicated region
    $region2: #{tpu_custom_call.1} parent=1 // pred_check
      _
    $region3: #{tpu_custom_call.1} parent=1 // pred_check_branch
      %18 = sbr.rel (0) target = $region5
    $region4: #{tpu_custom_call.1} parent=1 // pred_region
      %20 = vsyncadd [#allocation3], 0
      %s22 = sshll.u32 %s0, 4
      %s23 = int_to_ptr.hbm [resolvable:$true] %s22
      %s24 = sshll.u32 [#allocation2], 4
      %s25 = int_to_ptr.vmem [resolvable:$true] %s24
      %27 = dma.hbm_to_vmem [thread:$0]  %s23, 128, %s25, [#allocation3]
    $region5: #{tpu_custom_call.1} parent=1 // pred_fallthru
      _
    // Predicated region
    $region6: #{tpu_custom_call.1} parent=1 // pred_check
      _
    $region7: #{tpu_custom_call.1} parent=1 // pred_check_branch
      %29 = sbr.rel (0) target = $region9
    $region8: #{tpu_custom_call.1} parent=1 // pred_region
      _
    $region9: #{tpu_custom_call.1} parent=1 // pred_fallthru
      _
    // Predicated region
    $region10: #{tpu_custom_call.1} parent=1 // pred_check
      _
    $region11: #{tpu_custom_call.1} parent=1 // pred_check_branch
      %31 = sbr.rel (0) target = $region13
    $region12: #{tpu_custom_call.1} parent=1 // pred_region
      %33 = vsyncadd [#allocation5], 0
      %s35 = sshll.u32 %s2, 4
      %s36 = int_to_ptr.hbm [resolvable:$true] %s35
      %s37 = sshll.u32 [#allocation4], 4
      %s38 = int_to_ptr.vmem [resolvable:$true] %s37
      %40 = dma.hbm_to_vmem [thread:$0]  %s36, 16, %s38, [#allocation5]
    $region13: #{tpu_custom_call.1} parent=1 // pred_fallthru
      _
    // Predicated region
    $region14: #{tpu_custom_call.1} parent=1 // pred_check
      _
    $region15: #{tpu_custom_call.1} parent=1 // pred_check_branch
      %42 = sbr.rel (0) target = $region17
    $region16: #{tpu_custom_call.1} parent=1 // pred_region
      _
    $region17: #{tpu_custom_call.1} parent=1 // pred_fallthru
      _
    // Predicated region
    $region18: #{tpu_custom_call.1} parent=1 // pred_check
      _
    $region19: #{tpu_custom_call.1} parent=1 // pred_check_branch
      %44 = sbr.rel (0) target = $region21
    $region20: #{tpu_custom_call.1} parent=1 // pred_region
      %46 = vsyncadd [#allocation5], 0
      %s48 = sshll.u32 %s4, 4
      %s49 = int_to_ptr.hbm [resolvable:$true] %s48
      %s50 = sshll.u32 [#allocation6], 4
      %s51 = int_to_ptr.vmem [resolvable:$true] %s50
      %53 = dma.hbm_to_vmem [thread:$0]  %s49, 16, %s51, [#allocation5]
    $region21: #{tpu_custom_call.1} parent=1 // pred_fallthru
      _
    // Predicated region
    $region22: #{tpu_custom_call.1} parent=1 // pred_check
      _
    $region23: #{tpu_custom_call.1} parent=1 // pred_check_branch
      %55 = sbr.rel (0) target = $region25
    $region24: #{tpu_custom_call.1} parent=1 // pred_region
      %57 = vsyncadd [#allocation8], 0
      %s58 = sshll.u32 %s5, 4
      %s59 = int_to_ptr.hbm [resolvable:$true] %s58
      %s60 = sshll.u32 [#allocation7], 4
      %s61 = int_to_ptr.vmem [resolvable:$true] %s60
      %66 = dma.hbm_to_vmem [thread:$0]  %s59, 256, %s61, [#allocation8], 64, 64, 4
    $region25: #{tpu_custom_call.1} parent=1 // pred_fallthru
      _
    // Predicated region
    $region26: #{tpu_custom_call.1} parent=1 // pred_check
      _
    $region27: #{tpu_custom_call.1} parent=1 // pred_check_branch
      %68 = sbr.rel (0) target = $region29
    $region28: #{tpu_custom_call.1} parent=1 // pred_region
      _
    $region29: #{tpu_custom_call.1} parent=1 // pred_fallthru
      _
    // Predicated region
    $region30: #{tpu_custom_call.1} parent=1 // pred_check
      _
    $region31: #{tpu_custom_call.1} parent=1 // pred_check_branch
      %70 = sbr.rel (0) target = $region33
    $region32: #{tpu_custom_call.1} parent=1 // pred_region
      _
    $region33: #{tpu_custom_call.1} parent=1 // pred_fallthru
      _
    // Predicated region
    $region34: #{tpu_custom_call.1} parent=1 // pred_check
      _
    $region35: #{tpu_custom_call.1} parent=1 // pred_check_branch
      %72 = sbr.rel (0) target = $region37
    $region36: #{tpu_custom_call.1} parent=1 // pred_region
      _
    $region37: #{tpu_custom_call.1} parent=1 // pred_fallthru
      _
    // Predicated region
    $region38: #{tpu_custom_call.1} parent=1 // pred_check
      _
    $region39: #{tpu_custom_call.1} parent=1 // pred_check_branch
      %74 = sbr.rel (0) target = $region41
    $region40: #{tpu_custom_call.1} parent=1 // pred_region
      %76 = dma.done [#allocation3], 128
    $region41: #{tpu_custom_call.1} parent=1 // pred_fallthru
      _
    // Predicated region
    $region42: #{tpu_custom_call.1} parent=1 // pred_check
      _
    $region43: #{tpu_custom_call.1} parent=1 // pred_check_branch
      %78 = sbr.rel (0) target = $region45
    $region44: #{tpu_custom_call.1} parent=1 // pred_region
      %80 = dma.done [#allocation5], 16
    $region45: #{tpu_custom_call.1} parent=1 // pred_fallthru
      _
    // Predicated region
    $region46: #{tpu_custom_call.1} parent=1 // pred_check
      _
    $region47: #{tpu_custom_call.1} parent=1 // pred_check_branch
      %82 = sbr.rel (0) target = $region49
    $region48: #{tpu_custom_call.1} parent=1 // pred_region
      %84 = dma.done [#allocation5], 16
    $region49: #{tpu_custom_call.1} parent=1 // pred_fallthru
      _
    // Predicated region
    $region50: #{tpu_custom_call.1} parent=1 // pred_check
      _
    $region51: #{tpu_custom_call.1} parent=1 // pred_check_branch
      %86 = sbr.rel (0) target = $region53
    $region52: #{tpu_custom_call.1} parent=1 // pred_region
      %88 = dma.done [#allocation8], 256
    $region53: #{tpu_custom_call.1} parent=1 // pred_fallthru
      _
    %v90 = vld [vmem:[#allocation2] sm:$0xff]
    %v91 = vpack.c.bf16 %v90, %v90
    %v92 = vld [vmem:[%s1] sm:$0xf]
    %v93 = vld [vmem:[#allocation4] sm:$0x1]
    %v95 = vperm.slane %v93, 0
    %vm97 = vcmask 64512
    %v99 = vsel %vm97, %v91, 0
    %vm101 = vcmask 1043456
    %v103 = vsel %vm101, %v92, 0
    %105 = vmatpush.bf16.msra.mxu0 0
    %106 = vmatpush.bf16.msra.mxu0 0
    %107 = vmatpush.bf16.msra.mxu0 0
    %108 = vmatpush.bf16.msra.mxu0 0
    %109 = vmatpush.bf16.msra.mxu0 0
    %110 = vmatpush.bf16.msra.mxu0 0
    %111 = vmatpush.bf16.msra.mxu0 0
    %112 = vmatpush.bf16.msra.mxu0 %v103
    %113 = vmatmul.bf16.gmra.mxu0 %v99
    %v114 = vpop.f32.mrf.mxu0
    %v115 = vadd.f32 %v95, %v114
    %v116 = vpop.f32.mrf.mxu0
    %117 = vdwg.mxu0
    %v118 = vmax.f32 %v115, 0.0
    %v119 = vpack.c.bf16 %v118, %v118
    %v120 = vld [vmem:[%s3] sm:$0xf]
    %v121 = vld [vmem:[%s3 + $0x4] sm:$0xf]
    %v122 = vld [vmem:[%s3 + $0x8] sm:$0xf]
    %v123 = vld [vmem:[%s3 + $0xc] sm:$0xf]
    %v124 = vld [vmem:[#allocation6] sm:$0x1]
    %v126 = vperm.slane %v124, 0
    %v132 = vunpack.c.l.b16 %v120
    %v133 = vunpack.c.l.b16 %v121
    %v134 = vunpack.c.l.b16 %v122
    %v135 = vunpack.c.l.b16 %v123
    %v136 = vpack.c.b16 %v133, %v132
    %v137 = vpack.c.b16 %v135, %v134
    %vm140 = vcmask 261120
    %v142 = vsel %vm140, %v119, 0
    %144 = vmatpush.bf16.msra.mxu0 0
    %145 = vmatpush.bf16.msra.mxu0 0
    %146 = vmatpush.bf16.msra.mxu0 0
    %147 = vmatpush.bf16.msra.mxu0 0
    %148 = vmatpush.bf16.msra.mxu0 0
    %149 = vmatpush.bf16.msra.mxu0 0
    %150 = vmatpush.bf16.msra.mxu0 %v137
    %151 = vmatpush.bf16.msra.mxu0 %v136
    %152 = vmatmul.bf16.gmra.mxu0 %v142
    %v153 = vpop.f32.mrf.mxu0
    %v154 = vadd.f32 %v126, %v153
    %v155 = vpop.f32.mrf.mxu0
    %156 = vdwg.mxu0
    %v157 = vmax.f32 %v154, 0.0
    %v158 = vpack.c.bf16 %v157, %v157
    %v159 = vld [vmem:[#allocation7] sm:$0xf]
    %v160 = vld [vmem:[#allocation7 + $0x4] sm:$0xf]
    %v161 = vld [vmem:[#allocation7 + $0x8] sm:$0xf]
    %v162 = vld [vmem:[#allocation7 + $0xc] sm:$0xf]
    %v163 = vld [vmem:[%s6] sm:$0x1]
    %v165 = vperm.slane %v163, 0
    %v171 = vunpack.c.l.b16 %v159
    %v172 = vunpack.c.l.b16 %v160
    %v173 = vunpack.c.l.b16 %v161
    %v174 = vunpack.c.l.b16 %v162
    %v175 = vpack.c.b16 %v172, %v171
    %v176 = vpack.c.b16 %v174, %v173
    %v180 = vsel %vm140, %v158, 0
    %182 = vmatpush.bf16.msra.mxu0 0
    %183 = vmatpush.bf16.msra.mxu0 0
    %184 = vmatpush.bf16.msra.mxu0 0
    %185 = vmatpush.bf16.msra.mxu0 0
    %186 = vmatpush.bf16.msra.mxu0 0
    %187 = vmatpush.bf16.msra.mxu0 0
    %188 = vmatpush.bf16.msra.mxu0 %v176
    %189 = vmatpush.bf16.msra.mxu0 %v175
    %190 = vmatmul.bf16.gmra.mxu0 %v180
    %v191 = vpop.f32.mrf.mxu0
    %v192 = vadd.f32 %v165, %v191
    %v193 = vpop.f32.mrf.mxu0
    %194 = vdwg.mxu0
    %v195 = vmax.f32 %v192, 0.0
    %v196 = vpack.c.bf16 %v195, %v195
    %v197 = vld [vmem:[%s7] sm:$0xf]
    %v198 = vld [vmem:[%s7 + $0x4] sm:$0xf]
    %v199 = vld [vmem:[%s7 + $0x8] sm:$0xf]
    %v200 = vld [vmem:[%s7 + $0xc] sm:$0xf]
    %v201 = vld [vmem:[%s8] sm:$0x1]
    %v203 = vperm.slane %v201, 0
    %v209 = vunpack.c.l.b16 %v197
    %v210 = vunpack.c.l.b16 %v198
    %v211 = vunpack.c.l.b16 %v199
    %v212 = vunpack.c.l.b16 %v200
    %v213 = vpack.c.b16 %v210, %v209
    %v214 = vpack.c.b16 %v212, %v211
    %v218 = vsel %vm140, %v196, 0
    %220 = vmatpush.bf16.msra.mxu0 0
    %221 = vmatpush.bf16.msra.mxu0 0
    %222 = vmatpush.bf16.msra.mxu0 0
    %223 = vmatpush.bf16.msra.mxu0 0
    %224 = vmatpush.bf16.msra.mxu0 0
    %225 = vmatpush.bf16.msra.mxu0 0
    %226 = vmatpush.bf16.msra.mxu0 %v214
    %227 = vmatpush.bf16.msra.mxu0 %v213
    %228 = vmatmul.bf16.gmra.mxu0 %v218
    %v229 = vpop.f32.mrf.mxu0
    %v230 = vadd.f32 %v203, %v229
    %v231 = vpop.f32.mrf.mxu0
    %232 = vdwg.mxu0
    %vm233 = vcmask 31744
    %234 = vst.msk [vmem:[%s9] sm:$0xff] %vm233, %v230
    // Predicated region
    $region54: #{tpu_custom_call.1} parent=1 // pred_check
      _
    $region55: #{tpu_custom_call.1} parent=1 // pred_check_branch
      %236 = sbr.rel (0) target = $region57
    $region56: #{tpu_custom_call.1} parent=1 // pred_region
      _
    $region57: #{tpu_custom_call.1} parent=1 // pred_fallthru
      _
    // Predicated region
    $region58: #{tpu_custom_call.1} parent=1 // pred_check
      _
    $region59: #{tpu_custom_call.1} parent=1 // pred_check_branch
      %238 = sbr.rel (0) target = $region61
    $region60: #{tpu_custom_call.1} parent=1 // pred_region
      _
    $region61: #{tpu_custom_call.1} parent=1 // pred_fallthru
      _
    %239 = vsyncpa [#allocation3], 1
    %240 = vsyncpa [#allocation5], 1
    %241 = vsyncpa [#allocation8], 1

</llo_original>
